<compile_context>
chip_gen: v7x
topology: tpu7x:2x2x1
jax: 0.10.0
libtpu: 0.0.40
codegen_flags: <defaults>
</compile_context>

<pallas_src>
import functools

import jax
import jax.numpy as jnp
import numpy as np
from jax.experimental import pallas as pl
from jax.experimental.pallas import tpu as pltpu


# ----------------------------- box utilities (glue) -------------------------

def cxcy_to_xy(cxcy):
    return jnp.concatenate(
        [cxcy[:, :2] - cxcy[:, 2:] / 2.0, cxcy[:, :2] + cxcy[:, 2:] / 2.0], axis=1)


def xy_to_cxcy(xy):
    return jnp.concatenate(
        [(xy[:, :2] + xy[:, 2:]) / 2.0, xy[:, 2:] - xy[:, :2]], axis=1)


def cxcy_to_gcxgcy(cxcy, priors_cxcy):
    return jnp.concatenate(
        [(cxcy[:, :2] - priors_cxcy[:, :2]) / (priors_cxcy[:, 2:] / 10.0),
         jnp.log(cxcy[:, 2:] / priors_cxcy[:, 2:]) * 5.0], axis=1)


def find_jaccard_overlap(set1, set2):
    # set1: (n1, 4) xy, set2: (n2, 4) xy -> (n1, n2) IoU
    lower = jnp.maximum(set1[:, None, :2], set2[None, :, :2])
    upper = jnp.minimum(set1[:, None, 2:], set2[None, :, 2:])
    inter = jnp.clip(upper - lower, 0.0)
    inter_area = inter[..., 0] * inter[..., 1]
    area1 = (set1[:, 2] - set1[:, 0]) * (set1[:, 3] - set1[:, 1])
    area2 = (set2[:, 2] - set2[:, 0]) * (set2[:, 3] - set2[:, 1])
    union = area1[:, None] + area2[None, :] - inter_area
    return inter_area / union


# ------------------------------- Pallas kernel -------------------------------

_NEG = -1e30  # sentinel "minus infinity" (CE losses are always >= 0)


def _make_multibox_kernel(neg_pos_ratio, rank_chunk):
    ratio = float(neg_pos_ratio)

    def kernel(po_ref, to_ref, sc_ref, cls_ref, out_ref):
        # priors live on the lane axis in every operand
        scores = sc_ref[0].astype(jnp.float32)     # (C, P)
        cls = cls_ref[0]                           # (1, P) int32
        C, P = scores.shape

        # cross entropy per prior: logsumexp over classes (sublane reduction)
        # minus the true-class score gathered via a sublane one-hot.
        crow = jax.lax.broadcasted_iota(jnp.int32, (C, P), 0)
        onehot = (crow == cls).astype(jnp.float32)                       # (C, P)
        m = jnp.max(scores, axis=0, keepdims=True)                       # (1, P)
        lse = m + jnp.log(jnp.sum(jnp.exp(scores - m), axis=0, keepdims=True))
        ce = lse - jnp.sum(scores * onehot, axis=0, keepdims=True)       # (1, P)

        pos = cls != 0                                                   # (1, P)
        neg = jnp.logical_not(pos)
        posf = pos.astype(jnp.float32)
        n_pos = jnp.sum(posf)

        # smooth L1 (beta=1), summed over positive priors
        d = jnp.abs(po_ref[0].astype(jnp.float32) - to_ref[0].astype(jnp.float32))
        sl1 = jnp.where(d < 1.0, 0.5 * d * d, d - 0.5)                   # (4, P)
        loc_sum = jnp.sum(sl1 * posf)

        conf_pos_sum = jnp.sum(ce * posf)

        # ---- hard-negative mining ------------------------------------------
        # sum of the top-(ratio * n_pos) CE values among this image's negative
        # priors, via exact rank counting (tie-free), tiled in chunks of
        # `rank_chunk` priors so the (W, W) working set stays small.
        ce_neg = jnp.where(neg, ce, jnp.float32(_NEG))                   # (1, P)
        k = jnp.float32(ratio) * n_pos

        W = rank_chunk
        n_chunks = P // W
        r_iota = jax.lax.broadcasted_iota(jnp.int32, (W, W), 0)
        c_iota = jax.lax.broadcasted_iota(jnp.int32, (W, W), 1)
        eye = (r_iota == c_iota).astype(jnp.float32)                     # (W, W)

        # lane-row -> sublane-column chunks via eye-mask + lane reduce
        # (avoids a risky (1, W) -> (W, 1) relayout/transpose op).
        col_chunks = []
        for ri in range(n_chunks):
            rv = ce_neg[:, ri * W:(ri + 1) * W]                          # (1, W)
            col_chunks.append(jnp.sum(eye * rv, axis=1, keepdims=True))  # (W, 1)

        ones_row = jnp.ones((1, W), jnp.float32)
        hard_neg_sum = jnp.float32(0.0)
        for cj in range(n_chunks):
            col_vals = ce_neg[:, cj * W:(cj + 1) * W]                    # (1, W)
            rank = jnp.zeros((1, W), jnp.float32)
            for ri in range(n_chunks):
                greater = (col_chunks[ri] > col_vals).astype(jnp.float32)  # (W, W)
                # axis-0 reduction on the MXU instead of the VPU/XLU slots
                rank = rank + jnp.dot(ones_row, greater,
                                      preferred_element_type=jnp.float32)
            sel = (rank < k) & neg[:, cj * W:(cj + 1) * W]
            hard_neg_sum = hard_neg_sum + jnp.sum(
                jnp.where(sel, ce[:, cj * W:(cj + 1) * W], 0.0))

        # per-image partials in lanes 0..3 of this image's own output block
        lane = jax.lax.broadcasted_iota(jnp.int32, out_ref.shape, 2)
        out_ref[...] = jnp.where(
            lane == 0, loc_sum,
            jnp.where(lane == 1, n_pos,
                      jnp.where(lane == 2, conf_pos_sum,
                                jnp.where(lane == 3, hard_neg_sum, 0.0))))

    return kernel


@functools.partial(jax.jit, static_argnames=("neg_pos_ratio",))
def multibox_loss_sums(pred_offsets, truth_offsets, pred_scores, truth_classes,
                       neg_pos_ratio=3):
    """Returns f32 (4,): batch totals [loc_sum, n_pos, conf_pos_sum, hard_neg_sum]."""
    N, P, _ = pred_offsets.shape
    C = pred_scores.shape[2]

    # layout plumbing: put the prior axis on lanes (no dtype casts here).
    po = jnp.swapaxes(pred_offsets, 1, 2)               # (N, 4, P)
    to = jnp.swapaxes(truth_offsets, 1, 2)              # (N, 4, P)
    sc = jnp.swapaxes(pred_scores, 1, 2)                # (N, C, P)
    cls = truth_classes.astype(jnp.int32).reshape(N, 1, P)

    # chunk width for the O(P^2) rank counting; caps the (W, W) tile at a few
    # MiB so it fits v7x's 64 MiB VMEM (and the default scoped limit) even for
    # realistic SSD prior counts.
    rank_chunk = P if P <= 1024 else 1024
    if P % rank_chunk != 0:
        # TODO(synk): pad the prior axis (class 0 + masked CE) for odd P.
        raise ValueError("n_priors must be a multiple of the rank chunk width")

    partials = pl.pallas_call(
        _make_multibox_kernel(neg_pos_ratio, rank_chunk),
        out_shape=jax.ShapeDtypeStruct((N, 8, 128), jnp.float32),
        grid_spec=pltpu.PrefetchScalarGridSpec(
            num_scalar_prefetch=0,
            grid=(N,),
            in_specs=[
                pl.BlockSpec((1, 4, P), lambda i: (i, 0, 0)),
                pl.BlockSpec((1, 4, P), lambda i: (i, 0, 0)),
                pl.BlockSpec((1, C, P), lambda i: (i, 0, 0)),
                pl.BlockSpec((1, 1, P), lambda i: (i, 0, 0)),
            ],
            out_specs=pl.BlockSpec((1, 8, 128), lambda i: (i, 0, 0)),
        ),
        compiler_params=pltpu.CompilerParams(
            dimension_semantics=("parallel",)),   # per-image partials -> megacore
    )(po, to, sc, cls)

    return jnp.sum(partials[:, 0, :4], axis=0)           # (4,)


# ------------------------------ MultiBoxLoss ---------------------------------

class MultiBoxLossPallas:
    """JAX/Pallas port of MultiBoxLoss (focal_loss=False path)."""
    # TODO(synk): focal_loss=True branch (FocalLoss) not implemented; only the
    # default cross-entropy + hard-negative-mining path is ported.

    def __init__(self, priors_cxcy, threshold=0.5, neg_pos_ratio=3, alpha=1.0):
        self.priors_cxcy = priors_cxcy
        self.priors_xy = cxcy_to_xy(priors_cxcy)
        self.threshold = threshold
        self.neg_pos_ratio = neg_pos_ratio
        self.alpha = alpha

    def match_gt_priors(self, boxes, labels):
        # Plain-JAX glue replicating the PyTorch matching loop (tiny, data-dep).
        N = len(boxes)
        truth_offsets, truth_classes = [], []
        for i in range(N):
            n_objects = int(labels[i].shape[0])
            overlap = find_jaccard_overlap(self.priors_xy, boxes[i])   # (P, n_obj)
            prior_iou = jnp.max(overlap, axis=1)
            prior_obj = jnp.argmax(overlap, axis=1)
            object_prior = jnp.argmax(overlap, axis=0)                 # (n_obj,)
            for j in range(n_objects):
                prior_obj = prior_obj.at[object_prior[j]].set(j)
            prior_iou = prior_iou.at[object_prior].set(1.0)
            boxes_xy = boxes[i][prior_obj]                             # (P, 4)
            prior_class = labels[i][prior_obj]                         # (P,)
            prior_class = jnp.where(prior_iou < self.threshold, 0, prior_class)
            truth_offsets.append(
                cxcy_to_gcxgcy(xy_to_cxcy(boxes_xy), self.priors_cxcy))
            truth_classes.append(prior_class.astype(jnp.int32))
        return jnp.stack(truth_offsets), jnp.stack(truth_classes)

    def __call__(self, predicted_offsets, predicted_scores, boxes, labels):
        truth_offsets, truth_classes = self.match_gt_priors(boxes, labels)
        sums = multibox_loss_sums(predicted_offsets, truth_offsets,
                                  predicted_scores, truth_classes,
                                  neg_pos_ratio=self.neg_pos_ratio)
        loc_sum, n_pos, conf_pos, hard_neg = sums[0], sums[1], sums[2], sums[3]
        loc_loss = loc_sum / (4.0 * n_pos)          # SmoothL1Loss reduction='mean'
        conf_loss = (conf_pos + hard_neg) / n_pos
        return self.alpha * loc_loss + conf_loss


# --------------------------- pure-JAX reference ------------------------------

def reference_loss(pred_offsets, pred_scores, truth_offsets, truth_classes,
                   alpha=1.0, neg_pos_ratio=3):
    N, P, C = pred_scores.shape
    onehot = jax.nn.one_hot(truth_classes, C)
    lse = jax.nn.logsumexp(pred_scores, axis=-1)
    ce = lse - jnp.sum(pred_scores * onehot, axis=-1)   # (N, P)
    pos = truth_classes != 0
    n_pos = jnp.sum(pos)
    d = jnp.abs(pred_offsets - truth_offsets)
    sl1 = jnp.where(d < 1.0, 0.5 * d * d, d - 0.5)
    loc_loss = jnp.sum(sl1 * pos[..., None]) / (4.0 * n_pos)
    conf_pos = jnp.sum(jnp.where(pos, ce, 0.0))
    hard = 0.0
    idx = jnp.arange(P)
    for i in range(N):
        k = neg_pos_ratio * jnp.sum(pos[i])
        ce_neg = jnp.where(pos[i], -jnp.inf, ce[i])
        ce_sorted = jnp.sort(ce_neg)[::-1]
        hard = hard + jnp.sum(
            jnp.where((idx < k) & jnp.isfinite(ce_sorted), ce_sorted, 0.0))
    conf_loss = (conf_pos + hard) / n_pos
    return alpha * loc_loss + conf_loss


# ----------------------------------- main -------------------------------------

def make_priors(grid_size=8, scale=0.25):
    xs = (jnp.arange(grid_size, dtype=jnp.float32) + 0.5) / grid_size
    cx, cy = jnp.meshgrid(xs, xs, indexing="xy")
    cx, cy = cx.reshape(-1), cy.reshape(-1)
    wh = jnp.full_like(cx, scale)
    return jnp.stack([cx, cy, wh, wh], axis=1)   # (grid_size**2, 4) cxcywh


if __name__ == "__main__":
    N, P, C, n_obj = 2, 64, 8, 3

    priors_cxcy = make_priors(grid_size=8, scale=0.25)          # (64, 4)

    key = jax.random.PRNGKey(0)
    k1, k2, k3, k4, k5 = jax.random.split(key, 5)
    centers = jax.random.uniform(k1, (N, n_obj, 2), minval=0.25, maxval=0.75)
    wh = jax.random.uniform(k2, (N, n_obj, 2), minval=0.15, maxval=0.4)
    boxes_all = jnp.concatenate([centers - wh / 2, centers + wh / 2], axis=-1)
    labels_all = jax.random.randint(k3, (N, n_obj), 1, C)        # classes 1..C-1
    boxes = [boxes_all[i] for i in range(N)]
    labels = [labels_all[i] for i in range(N)]

    predicted_offsets = jax.random.normal(k4, (N, P, 4), dtype=jnp.float32)
    predicted_scores = jax.random.normal(k5, (N, P, C), dtype=jnp.float32)

    criterion = MultiBoxLossPallas(priors_cxcy, threshold=0.5,
                                   neg_pos_ratio=3, alpha=1.0)
    loss = criterion(predicted_offsets, predicted_scores, boxes, labels)
    loss = jax.block_until_ready(loss)

    # silent correctness check against a pure-JAX reference
    to_, tc_ = criterion.match_gt_priors(boxes, labels)
    ref = reference_loss(predicted_offsets, predicted_scores, to_, tc_,
                         alpha=1.0, neg_pos_ratio=3)
    np.testing.assert_allclose(np.asarray(loss), np.asarray(ref),
                               rtol=1e-4, atol=1e-4)

    print("KERNEL_OK")
</pallas_src>

<mosaic_0001>
module attributes {stable_mosaic.version = 11 : i64} {
  func.func @kernel(%arg0: i32, %arg1: memref<1x4x64xf32, #tpu.memory_space<vmem>>, %arg2: memref<1x4x64xf32, #tpu.memory_space<vmem>>, %arg3: memref<1x8x64xf32, #tpu.memory_space<vmem>>, %arg4: memref<1x1x64xi32, #tpu.memory_space<vmem>>, %arg5: memref<1x8x128xf32, #tpu.memory_space<vmem>>) attributes {dimension_semantics = [#tpu.dimension_semantics<parallel>], iteration_bounds = array<i64: 2>, scalar_prefetch = 0 : i64, scratch_operands = 0 : i64, tpu.core_type = #tpu.core_type<tc>, window_params = [{transform_indices = @transform_0, window_bounds = array<i64: 1, 4, 64>}, {transform_indices = @transform_1, window_bounds = array<i64: 1, 4, 64>}, {transform_indices = @transform_2, window_bounds = array<i64: 1, 8, 64>}, {transform_indices = @transform_3, window_bounds = array<i64: 1, 1, 64>}, {transform_indices = @transform_4, window_bounds = array<i64: 1, 8, 128>}]} {
    %c0 = arith.constant 0 : index
    %c0_0 = arith.constant 0 : index
    %c0_1 = arith.constant 0 : index
    %0 = vector.load %arg3[%c0, %c0_0, %c0_1] : memref<1x8x64xf32, #tpu.memory_space<vmem>>, vector<1x8x64xf32>
    %1 = vector.shape_cast %0 : vector<1x8x64xf32> to vector<8x64xf32>
    %c0_2 = arith.constant 0 : index
    %c0_3 = arith.constant 0 : index
    %c0_4 = arith.constant 0 : index
    %2 = vector.load %arg4[%c0_2, %c0_3, %c0_4] : memref<1x1x64xi32, #tpu.memory_space<vmem>>, vector<1x1x64xi32>
    %3 = vector.shape_cast %2 : vector<1x1x64xi32> to vector<1x64xi32>
    %4 = tpu.iota {dimensions = array<i32: 0>} : vector<8x64xi32>
    %5 = vector.broadcast %3 : vector<1x64xi32> to vector<8x64xi32>
    %6 = arith.cmpi eq, %4, %5 : vector<8x64xi32>
    %7 = arith.extui %6 : vector<8x64xi1> to vector<8x64xi32>
    %8 = arith.sitofp %7 : vector<8x64xi32> to vector<8x64xf32>
    %cst = arith.constant dense<0xFF800000> : vector<64xf32>
    %9 = vector.multi_reduction <maximumf>, %1, %cst [0] : vector<8x64xf32> to vector<64xf32>
    %10 = vector.shape_cast %9 : vector<64xf32> to vector<1x64xf32>
    %11 = vector.broadcast %10 : vector<1x64xf32> to vector<8x64xf32>
    %12 = arith.subf %1, %11 : vector<8x64xf32>
    %13 = math.exp %12 : vector<8x64xf32>
    %cst_5 = arith.constant dense<0.000000e+00> : vector<64xf32>
    %14 = vector.multi_reduction <add>, %13, %cst_5 [0] : vector<8x64xf32> to vector<64xf32>
    %15 = vector.shape_cast %14 : vector<64xf32> to vector<1x64xf32>
    %16 = math.log %15 : vector<1x64xf32>
    %17 = arith.addf %10, %16 : vector<1x64xf32>
    %18 = arith.mulf %1, %8 : vector<8x64xf32>
    %cst_6 = arith.constant dense<0.000000e+00> : vector<64xf32>
    %19 = vector.multi_reduction <add>, %18, %cst_6 [0] : vector<8x64xf32> to vector<64xf32>
    %20 = vector.shape_cast %19 : vector<64xf32> to vector<1x64xf32>
    %21 = arith.subf %17, %20 : vector<1x64xf32>
    %c0_i32 = arith.constant 0 : i32
    %22 = vector.broadcast %c0_i32 : i32 to vector<1x64xi32>
    %23 = arith.cmpi ne, %3, %22 : vector<1x64xi32>
    %cst_7 = arith.constant dense<true> : vector<1x64xi1>
    %24 = arith.xori %23, %cst_7 : vector<1x64xi1>
    %25 = arith.extui %23 : vector<1x64xi1> to vector<1x64xi32>
    %26 = arith.sitofp %25 : vector<1x64xi32> to vector<1x64xf32>
    %27 = vector.shape_cast %26 : vector<1x64xf32> to vector<1x1x64xf32>
    %cst_8 = arith.constant dense<0.000000e+00> : vector<1xf32>
    %28 = vector.multi_reduction <add>, %27, %cst_8 [1, 2] : vector<1x1x64xf32> to vector<1xf32>
    %29 = vector.shape_cast %28 : vector<1xf32> to vector<1x1x1xf32>
    %30 = vector.extract %29[0, 0, 0] : f32 from vector<1x1x1xf32>
    %c0_9 = arith.constant 0 : index
    %c0_10 = arith.constant 0 : index
    %c0_11 = arith.constant 0 : index
    %31 = vector.load %arg1[%c0_9, %c0_10, %c0_11] : memref<1x4x64xf32, #tpu.memory_space<vmem>>, vector<1x4x64xf32>
    %32 = vector.shape_cast %31 : vector<1x4x64xf32> to vector<4x64xf32>
    %c0_12 = arith.constant 0 : index
    %c0_13 = arith.constant 0 : index
    %c0_14 = arith.constant 0 : index
    %33 = vector.load %arg2[%c0_12, %c0_13, %c0_14] : memref<1x4x64xf32, #tpu.memory_space<vmem>>, vector<1x4x64xf32>
    %34 = vector.shape_cast %33 : vector<1x4x64xf32> to vector<4x64xf32>
    %35 = arith.subf %32, %34 : vector<4x64xf32>
    %36 = math.absf %35 : vector<4x64xf32>
    %cst_15 = arith.constant 1.000000e+00 : f32
    %37 = vector.broadcast %cst_15 : f32 to vector<4x64xf32>
    %38 = arith.cmpf olt, %36, %37 : vector<4x64xf32>
    %cst_16 = arith.constant 5.000000e-01 : f32
    %39 = vector.broadcast %cst_16 : f32 to vector<4x64xf32>
    %40 = arith.mulf %39, %36 : vector<4x64xf32>
    %41 = arith.mulf %40, %36 : vector<4x64xf32>
    %cst_17 = arith.constant 5.000000e-01 : f32
    %42 = vector.broadcast %cst_17 : f32 to vector<4x64xf32>
    %43 = arith.subf %36, %42 : vector<4x64xf32>
    %44 = arith.select %38, %41, %43 : vector<4x64xi1>, vector<4x64xf32>
    %45 = vector.broadcast %26 : vector<1x64xf32> to vector<4x64xf32>
    %46 = arith.mulf %44, %45 : vector<4x64xf32>
    %47 = vector.shape_cast %46 : vector<4x64xf32> to vector<1x4x64xf32>
    %cst_18 = arith.constant dense<0.000000e+00> : vector<1xf32>
    %48 = vector.multi_reduction <add>, %47, %cst_18 [1, 2] : vector<1x4x64xf32> to vector<1xf32>
    %49 = vector.shape_cast %48 : vector<1xf32> to vector<1x1x1xf32>
    %50 = vector.extract %49[0, 0, 0] : f32 from vector<1x1x1xf32>
    %51 = arith.mulf %21, %26 : vector<1x64xf32>
    %52 = vector.shape_cast %51 : vector<1x64xf32> to vector<1x1x64xf32>
    %cst_19 = arith.constant dense<0.000000e+00> : vector<1xf32>
    %53 = vector.multi_reduction <add>, %52, %cst_19 [1, 2] : vector<1x1x64xf32> to vector<1xf32>
    %54 = vector.shape_cast %53 : vector<1xf32> to vector<1x1x1xf32>
    %55 = vector.extract %54[0, 0, 0] : f32 from vector<1x1x1xf32>
    %cst_20 = arith.constant -1.000000e+30 : f32
    %56 = vector.broadcast %cst_20 : f32 to vector<1x64xf32>
    %57 = arith.select %24, %21, %56 : vector<1x64xi1>, vector<1x64xf32>
    %cst_21 = arith.constant 3.000000e+00 : f32
    %58 = arith.mulf %cst_21, %30 : f32
    %59 = tpu.iota {dimensions = array<i32: 0>} : vector<64x64xi32>
    %60 = tpu.iota {dimensions = array<i32: 1>} : vector<64x64xi32>
    %61 = arith.cmpi eq, %59, %60 : vector<64x64xi32>
    %62 = arith.extui %61 : vector<64x64xi1> to vector<64x64xi32>
    %63 = arith.sitofp %62 : vector<64x64xi32> to vector<64x64xf32>
    %64 = vector.broadcast %57 : vector<1x64xf32> to vector<64x64xf32>
    %65 = arith.mulf %63, %64 : vector<64x64xf32>
    %cst_22 = arith.constant dense<0.000000e+00> : vector<64xf32>
    %66 = vector.multi_reduction <add>, %65, %cst_22 [1] : vector<64x64xf32> to vector<64xf32>
    %67 = vector.shape_cast %66 : vector<64xf32> to vector<64x1xf32>
    %cst_23 = arith.constant 1.000000e+00 : f32
    %68 = vector.broadcast %cst_23 : f32 to vector<1x64xf32>
    %cst_24 = arith.constant 0.000000e+00 : f32
    %69 = vector.broadcast %cst_24 : f32 to vector<1x64xf32>
    %70 = vector.broadcast %67 : vector<64x1xf32> to vector<64x64xf32>
    %71 = vector.broadcast %57 : vector<1x64xf32> to vector<64x64xf32>
    %72 = arith.cmpf ogt, %70, %71 : vector<64x64xf32>
    %73 = arith.extui %72 : vector<64x64xi1> to vector<64x64xi32>
    %74 = arith.sitofp %73 : vector<64x64xi32> to vector<64x64xf32>
    %cst_25 = arith.constant dense<0.000000e+00> : vector<1x64xf32>
    %75 = tpu.matmul %68, %74, %cst_25 {dimension_numbers = #tpu.dot_dimension_numbers<[1], [0], [0], [1], [0, 0, 1, 1], [], []>} : vector<1x64xf32>, vector<64x64xf32>, vector<1x64xf32> -> vector<1x64xf32>
    %76 = arith.addf %69, %75 : vector<1x64xf32>
    %77 = vector.broadcast %58 : f32 to vector<1x64xf32>
    %78 = arith.cmpf olt, %76, %77 : vector<1x64xf32>
    %79 = arith.andi %78, %24 : vector<1x64xi1>
    %cst_26 = arith.constant 0.000000e+00 : f32
    %80 = vector.broadcast %cst_26 : f32 to vector<1x64xf32>
    %81 = arith.select %79, %21, %80 : vector<1x64xi1>, vector<1x64xf32>
    %82 = vector.shape_cast %81 : vector<1x64xf32> to vector<1x1x64xf32>
    %cst_27 = arith.constant dense<0.000000e+00> : vector<1xf32>
    %83 = vector.multi_reduction <add>, %82, %cst_27 [1, 2] : vector<1x1x64xf32> to vector<1xf32>
    %84 = vector.shape_cast %83 : vector<1xf32> to vector<1x1x1xf32>
    %85 = vector.extract %84[0, 0, 0] : f32 from vector<1x1x1xf32>
    %cst_28 = arith.constant 0.000000e+00 : f32
    %86 = arith.addf %cst_28, %85 : f32
    %87 = tpu.iota {dimensions = array<i32: 2>} : vector<1x8x128xi32>
    %c0_i32_29 = arith.constant 0 : i32
    %88 = vector.broadcast %c0_i32_29 : i32 to vector<1x8x128xi32>
    %89 = arith.cmpi eq, %87, %88 : vector<1x8x128xi32>
    %c1_i32 = arith.constant 1 : i32
    %90 = vector.broadcast %c1_i32 : i32 to vector<1x8x128xi32>
    %91 = arith.cmpi eq, %87, %90 : vector<1x8x128xi32>
    %c2_i32 = arith.constant 2 : i32
    %92 = vector.broadcast %c2_i32 : i32 to vector<1x8x128xi32>
    %93 = arith.cmpi eq, %87, %92 : vector<1x8x128xi32>
    %c3_i32 = arith.constant 3 : i32
    %94 = vector.broadcast %c3_i32 : i32 to vector<1x8x128xi32>
    %95 = arith.cmpi eq, %87, %94 : vector<1x8x128xi32>
    %cst_30 = arith.constant 0.000000e+00 : f32
    %96 = vector.broadcast %86 : f32 to vector<1x8x128xf32>
    %97 = vector.broadcast %cst_30 : f32 to vector<1x8x128xf32>
    %98 = arith.select %95, %96, %97 : vector<1x8x128xi1>, vector<1x8x128xf32>
    %99 = vector.broadcast %55 : f32 to vector<1x8x128xf32>
    %100 = arith.select %93, %99, %98 : vector<1x8x128xi1>, vector<1x8x128xf32>
    %101 = vector.broadcast %30 : f32 to vector<1x8x128xf32>
    %102 = arith.select %91, %101, %100 : vector<1x8x128xi1>, vector<1x8x128xf32>
    %103 = vector.broadcast %50 : f32 to vector<1x8x128xf32>
    %104 = arith.select %89, %103, %102 : vector<1x8x128xi1>, vector<1x8x128xf32>
    %c0_31 = arith.constant 0 : index
    %c0_32 = arith.constant 0 : index
    %c0_33 = arith.constant 0 : index
    %105 = vector.load %arg5[%c0_31, %c0_32, %c0_33] : memref<1x8x128xf32, #tpu.memory_space<vmem>>, vector<1x8x128xf32>
    tpu.vector_store %arg5[%c0_31, %c0_32, %c0_33], %104 {strides = array<i32>} : memref<1x8x128xf32, #tpu.memory_space<vmem>>, vector<1x8x128xf32>,
    return
  }
  func.func @transform_0(%arg0: i32) -> (i32, i32, i32) {
    %c0_i32 = arith.constant 0 : i32
    %c0_i32_0 = arith.constant 0 : i32
    %c0_i32_1 = arith.constant 0 : i32
    return %arg0, %c0_i32, %c0_i32_0 : i32, i32, i32
  }
  func.func @transform_1(%arg0: i32) -> (i32, i32, i32) {
    %c0_i32 = arith.constant 0 : i32
    %c0_i32_0 = arith.constant 0 : i32
    %c0_i32_1 = arith.constant 0 : i32
    return %arg0, %c0_i32, %c0_i32_0 : i32, i32, i32
  }
  func.func @transform_2(%arg0: i32) -> (i32, i32, i32) {
    %c0_i32 = arith.constant 0 : i32
    %c0_i32_0 = arith.constant 0 : i32
    %c0_i32_1 = arith.constant 0 : i32
    return %arg0, %c0_i32, %c0_i32_0 : i32, i32, i32
  }
  func.func @transform_3(%arg0: i32) -> (i32, i32, i32) {
    %c0_i32 = arith.constant 0 : i32
    %c0_i32_0 = arith.constant 0 : i32
    %c0_i32_1 = arith.constant 0 : i32
    return %arg0, %c0_i32, %c0_i32_0 : i32, i32, i32
  }
  func.func @transform_4(%arg0: i32) -> (i32, i32, i32) {
    %c0_i32 = arith.constant 0 : i32
    %c0_i32_0 = arith.constant 0 : i32
    %c0_i32_1 = arith.constant 0 : i32
    return %arg0, %c0_i32, %c0_i32_0 : i32, i32, i32
  }
}

</mosaic_0001>

<llo_original>
// kernel: multibox_loss_sums.1
$region0: #{multibox_loss_sums.1}
  #allocation0 [shape = 'u32[]', space=smem, size = 0x4, offset = 0x4, fixed_abs, tag = 'smem constant byte address 0x4 - core index']
  #allocation1 [shape = 'u32[144,128]{1,0:T(1,128)}', space=vmem, size = 0x12000, scoped, tag = 'internal scratch']
  %s0 = inlined_call_operand.hbm [shape: f32[2,4,64], index: 0, kind: input, shape index: {}]
  %s1 = inlined_call_operand.hbm [shape: f32[2,4,64], index: 1, kind: input, shape index: {}]
  %s2 = inlined_call_operand.vmem [shape: f32[2,8,64], index: 2, kind: input, shape index: {}]
  %s3 = inlined_call_operand.vmem [shape: s32[2,1,64], index: 3, kind: input, shape index: {}]
  %s4 = inlined_call_operand.vmem [shape: f32[2,8,128], index: 4, kind: output, shape index: {}]
  %s5 = sld [smem:[#allocation0]]
  $region57: #{multibox_loss_sums.1} parent=0
    _
  %s7 = ssub.s32 1, %s5
  %s8 = scalar_select 0, %s7, %s5
  $region1: #{multibox_loss_sums.1} parent=0
    #allocation2 [shape = 'u8[4096]{0}', space=vmem, size = 0x1000, scoped, tag = 'input window, operand 0']
    #allocation3 [shape = 's32[2]{0}', space=sflag, size = 0x8, scoped, tag = 'scoped memory for multibox_loss_sums.1']
    #allocation4 [shape = 'u8[4096]{0}', space=vmem, size = 0x1000, scoped, tag = 'input window, operand 1']
    #allocation5 [shape = 's32[2]{0}', space=sflag, size = 0x8, scoped, tag = 'scoped memory for multibox_loss_sums.1']
    %9 = vsyncpa [#allocation3], 0
    %s10 = scalar_lea.sflag [#allocation3], 1
    %11 = vsyncpa %s10, 0
    %12 = vsyncpa [#allocation5], 0
    %s13 = scalar_lea.sflag [#allocation5], 1
    %14 = vsyncpa %s13, 0
    loop: start=0, step=1, limit=4
    $region2: #{multibox_loss_sums.1} parent=1 // loop_pre_header
      _
    $region3: #{multibox_loss_sums.1} parent=1 // loop_header
      %s16 = sphi 0, %s20
      %p17 = scmp.ge.s32.totalorder %s16, 4
      %s26 = sphi 0, %s28
      %s29 = sphi 0, %s26
      %s30 = sphi 0, %s29
      %s46 = sphi 0, %s30
      %s52 = sphi 0, %s54
      %s55 = sphi 0, %s52
      %s56 = sphi 0, %s55
      %s72 = sphi 0, %s56
      %s78 = sphi 0, %s80
      %s81 = sphi 0, %s78
      %s82 = sphi 0, %s81
      %s98 = sphi 0, %s82
      %s104 = sphi 0, %s106
      %s107 = sphi 0, %s104
      %s108 = sphi 0, %s107
      %s124 = sphi 0, %s108
      %s130 = sphi 0, %s132
      %s133 = sphi 0, %s130
      %s134 = sphi 0, %s133
      %s150 = sphi 0, %s134
    $region4: #{multibox_loss_sums.1} parent=1 // loop_header_branch
      %19 = sbr.rel (%p17) target = $region8
    $region5: #{multibox_loss_sums.1} parent=1 // loop_body
      %s21 = ssub.s32 %s16, 1
      %s22 = ssub.s32 %s16, 2
      %s23 = sadd.s32 %s16, 1
      %s24 = ssub.s32 %s16, %s23
      %p25 = scmp.eq.s32.totalorder %s24, 0
      %s27 = sadd.s32 %s26, 1
      %s28 = scalar_select %p25, %s26, %s27
      %p31 = pneg %p25
      %p32 = scmp.eq.s32.totalorder %s16, 1
      %p33 = por %p31, %p32
      %p34 = scmp.ne.s32.totalorder %s26, %s29
      %p35 = scmp.eq.s32.totalorder %s16, 0
      %p36 = por %p34, %p35
      %p37 = scmp.ne.s32.totalorder %s26, %s29
      %p38 = scmp.eq.s32.totalorder %s21, 1
      %p39 = por %p37, %p38
      %p40 = scmp.ne.s32.totalorder %s29, %s30
      %p41 = scmp.eq.s32.totalorder %s21, 0
      %p42 = por %p40, %p41
      %p43 = scmp.ne.s32.totalorder %s29, %s30
      %p44 = scmp.eq.s32.totalorder %s22, 1
      %p45 = por %p43, %p44
      %p47 = scmp.ne.s32.totalorder %s30, %s46
      %p48 = scmp.eq.s32.totalorder %s22, 0
      %p49 = por %p47, %p48
      %s50 = ssub.s32 %s16, %s23
      %p51 = scmp.eq.s32.totalorder %s50, 0
      %s53 = sadd.s32 %s52, 1
      %s54 = scalar_select %p51, %s52, %s53
      %p57 = pneg %p51
      %p58 = scmp.eq.s32.totalorder %s16, 1
      %p59 = por %p57, %p58
      %p60 = scmp.ne.s32.totalorder %s52, %s55
      %p61 = scmp.eq.s32.totalorder %s16, 0
      %p62 = por %p60, %p61
      %p63 = scmp.ne.s32.totalorder %s52, %s55
      %p64 = scmp.eq.s32.totalorder %s21, 1
      %p65 = por %p63, %p64
      %p66 = scmp.ne.s32.totalorder %s55, %s56
      %p67 = scmp.eq.s32.totalorder %s21, 0
      %p68 = por %p66, %p67
      %p69 = scmp.ne.s32.totalorder %s55, %s56
      %p70 = scmp.eq.s32.totalorder %s22, 1
      %p71 = por %p69, %p70
      %p73 = scmp.ne.s32.totalorder %s56, %s72
      %p74 = scmp.eq.s32.totalorder %s22, 0
      %p75 = por %p73, %p74
      %s76 = ssub.s32 %s16, %s23
      %p77 = scmp.eq.s32.totalorder %s76, 0
      %s79 = sadd.s32 %s78, 1
      %s80 = scalar_select %p77, %s78, %s79
      %p83 = pneg %p77
      %p84 = scmp.eq.s32.totalorder %s16, 1
      %p85 = por %p83, %p84
      %p86 = scmp.ne.s32.totalorder %s78, %s81
      %p87 = scmp.eq.s32.totalorder %s16, 0
      %p88 = por %p86, %p87
      %p89 = scmp.ne.s32.totalorder %s78, %s81
      %p90 = scmp.eq.s32.totalorder %s21, 1
      %p91 = por %p89, %p90
      %p92 = scmp.ne.s32.totalorder %s81, %s82
      %p93 = scmp.eq.s32.totalorder %s21, 0
      %p94 = por %p92, %p93
      %p95 = scmp.ne.s32.totalorder %s81, %s82
      %p96 = scmp.eq.s32.totalorder %s22, 1
      %p97 = por %p95, %p96
      %p99 = scmp.ne.s32.totalorder %s82, %s98
      %p100 = scmp.eq.s32.totalorder %s22, 0
      %p101 = por %p99, %p100
      %s102 = ssub.s32 %s16, %s23
      %p103 = scmp.eq.s32.totalorder %s102, 0
      %s105 = sadd.s32 %s104, 1
      %s106 = scalar_select %p103, %s104, %s105
      %p109 = pneg %p103
      %p110 = scmp.eq.s32.totalorder %s16, 1
      %p111 = por %p109, %p110
      %p112 = scmp.ne.s32.totalorder %s104, %s107
      %p113 = scmp.eq.s32.totalorder %s16, 0
      %p114 = por %p112, %p113
      %p115 = scmp.ne.s32.totalorder %s104, %s107
      %p116 = scmp.eq.s32.totalorder %s21, 1
      %p117 = por %p115, %p116
      %p118 = scmp.ne.s32.totalorder %s107, %s108
      %p119 = scmp.eq.s32.totalorder %s21, 0
      %p120 = por %p118, %p119
      %p121 = scmp.ne.s32.totalorder %s107, %s108
      %p122 = scmp.eq.s32.totalorder %s22, 1
      %p123 = por %p121, %p122
      %p125 = scmp.ne.s32.totalorder %s108, %s124
      %p126 = scmp.eq.s32.totalorder %s22, 0
      %p127 = por %p125, %p126
      %s128 = ssub.s32 %s16, %s23
      %p129 = scmp.eq.s32.totalorder %s128, 0
      %s131 = sadd.s32 %s130, 1
      %s132 = scalar_select %p129, %s130, %s131
      %p135 = pneg %p129
      %p136 = scmp.eq.s32.totalorder %s16, 1
      %p137 = por %p135, %p136
      %p138 = scmp.ne.s32.totalorder %s130, %s133
      %p139 = scmp.eq.s32.totalorder %s16, 0
      %p140 = por %p138, %p139
      %p141 = scmp.ne.s32.totalorder %s130, %s133
      %p142 = scmp.eq.s32.totalorder %s21, 1
      %p143 = por %p141, %p142
      %p144 = scmp.ne.s32.totalorder %s133, %s134
      %p145 = scmp.eq.s32.totalorder %s21, 0
      %p146 = por %p144, %p145
      %p147 = scmp.ne.s32.totalorder %s133, %s134
      %p148 = scmp.eq.s32.totalorder %s22, 1
      %p149 = por %p147, %p148
      %p151 = scmp.ne.s32.totalorder %s134, %s150
      %p152 = scmp.eq.s32.totalorder %s22, 0
      %p153 = por %p151, %p152
      %p154 = scmp.le.s32.totalorder 1, %s16
      %p155 = scmp.lt.s32.totalorder %s16, 3
      %p156 = pnand %p154, %p155
      %p157 = pneg %p156
      // Predicated region
      $region9: #{multibox_loss_sums.1} parent=5 // pred_check
        _
      $region10: #{multibox_loss_sums.1} parent=5 // pred_check_branch
        %159 = sbr.rel (%p156) target = $region12
      $region11: #{multibox_loss_sums.1} parent=5 // pred_region
        %s160 = ssub.s32 %s16, 1
      $region12: #{multibox_loss_sums.1} parent=5 // pred_fallthru
        _
      %p161 = scmp.lt.s32.totalorder %s16, 2
      // Predicated region
      $region13: #{multibox_loss_sums.1} parent=5 // pred_check
        %p162 = pneg %p161
      $region14: #{multibox_loss_sums.1} parent=5 // pred_check_branch
        %164 = sbr.rel (%p162) target = $region16
      $region15: #{multibox_loss_sums.1} parent=5 // pred_region
        // Predicated region
        $region17: #{multibox_loss_sums.1} parent=15 // pred_check
          %p165 = pneg %p36
        $region18: #{multibox_loss_sums.1} parent=15 // pred_check_branch
          %167 = sbr.rel (%p165) target = $region20
        $region19: #{multibox_loss_sums.1} parent=15 // pred_region
          %s168 = sand.u32 %s26, 1
          %s169 = scalar_lea.sflag [#allocation3], %s168
          %s170 = sand.u32 %s26, 1
          %s171 = smul.addr %s170, 4
          %s172 = scalar_lea.vmem [#allocation2], %s171
          %s174 = ssub.s32 64, 64
          %175 = vsyncadd %s169, %s174
          %s176 = smul.addr %s16, 64
          %s177 = scalar_lea.hbm %s0, %s176
          %s179 = sshll.u32 %s172, 4
          %s180 = int_to_ptr.vmem [resolvable:$true] %s179
          %182 = dma.hbm_to_vmem [thread:$0]  %s177, 64, %s180, %s169
        $region20: #{multibox_loss_sums.1} parent=15 // pred_fallthru
          _
        // Predicated region
        $region21: #{multibox_loss_sums.1} parent=15 // pred_check
          %p183 = pneg %p62
        $region22: #{multibox_loss_sums.1} parent=15 // pred_check_branch
          %185 = sbr.rel (%p183) target = $region24
        $region23: #{multibox_loss_sums.1} parent=15 // pred_region
          %s186 = sand.u32 %s52, 1
          %s187 = scalar_lea.sflag [#allocation5], %s186
          %s188 = sand.u32 %s52, 1
          %s189 = smul.addr %s188, 4
          %s190 = scalar_lea.vmem [#allocation4], %s189
          %s192 = ssub.s32 64, 64
          %193 = vsyncadd %s187, %s192
          %s194 = smul.addr %s16, 64
          %s195 = scalar_lea.hbm %s1, %s194
          %s197 = sshll.u32 %s190, 4
          %s198 = int_to_ptr.vmem [resolvable:$true] %s197
          %200 = dma.hbm_to_vmem [thread:$0]  %s195, 64, %s198, %s187
        $region24: #{multibox_loss_sums.1} parent=15 // pred_fallthru
          _
        // Predicated region
        $region25: #{multibox_loss_sums.1} parent=15 // pred_check
          %p201 = pneg %p88
        $region26: #{multibox_loss_sums.1} parent=15 // pred_check_branch
          %203 = sbr.rel (%p201) target = $region28
        $region27: #{multibox_loss_sums.1} parent=15 // pred_region
          %p204 = scmp.lt.s32.totalorder %s16, 1
          %s205 = scalar_select %p204, %s16, 1
          %s206 = smul.addr %s205, 8
          %s207 = scalar_lea.vmem %s2, %s206
        $region28: #{multibox_loss_sums.1} parent=15 // pred_fallthru
          _
        // Predicated region
        $region29: #{multibox_loss_sums.1} parent=15 // pred_check
          %p208 = pneg %p114
        $region30: #{multibox_loss_sums.1} parent=15 // pred_check_branch
          %210 = sbr.rel (%p208) target = $region32
        $region31: #{multibox_loss_sums.1} parent=15 // pred_region
          %p211 = scmp.lt.s32.totalorder %s16, 1
          %s212 = scalar_select %p211, %s16, 1
          %s213 = scalar_lea.vmem %s3, %s212
        $region32: #{multibox_loss_sums.1} parent=15 // pred_fallthru
          _
      $region16: #{multibox_loss_sums.1} parent=5 // pred_fallthru
        _
      %p214 = scmp.le.s32.totalorder 1, %s16
      %p215 = scmp.lt.s32.totalorder %s16, 3
      %p216 = pnand %p214, %p215
      %p217 = pneg %p216
      // Predicated region
      $region33: #{multibox_loss_sums.1} parent=5 // pred_check
        _
      $region34: #{multibox_loss_sums.1} parent=5 // pred_check_branch
        %219 = sbr.rel (%p216) target = $region36
      $region35: #{multibox_loss_sums.1} parent=5 // pred_region
        %s220 = ssub.s32 %s16, 1
        %s221 = sand.u32 %s29, 1
        %s222 = scalar_lea.sflag [#allocation3], %s221
        %s223 = sand.u32 %s29, 1
        %s224 = smul.addr %s223, 4
        %s225 = scalar_lea.vmem [#allocation2], %s224
        // Predicated region
        $region37: #{multibox_loss_sums.1} parent=35 // pred_check
          %p226 = pneg %p42
        $region38: #{multibox_loss_sums.1} parent=35 // pred_check_branch
          %228 = sbr.rel (%p226) target = $region40
        $region39: #{multibox_loss_sums.1} parent=35 // pred_region
          %229 = dma.done %s222, 64
        $region40: #{multibox_loss_sums.1} parent=35 // pred_fallthru
          _
        %s230 = sand.u32 %s55, 1
        %s231 = scalar_lea.sflag [#allocation5], %s230
        %s232 = sand.u32 %s55, 1
        %s233 = smul.addr %s232, 4
        %s234 = scalar_lea.vmem [#allocation4], %s233
        // Predicated region
        $region41: #{multibox_loss_sums.1} parent=35 // pred_check
          %p235 = pneg %p68
        $region42: #{multibox_loss_sums.1} parent=35 // pred_check_branch
          %237 = sbr.rel (%p235) target = $region44
        $region43: #{multibox_loss_sums.1} parent=35 // pred_region
          %238 = dma.done %s231, 64
        $region44: #{multibox_loss_sums.1} parent=35 // pred_fallthru
          _
        %s239 = sand.u32 %s29, 1
        %s240 = scalar_lea.sflag [#allocation3], %s239
        %s241 = sand.u32 %s29, 1
        %s242 = smul.addr %s241, 4
        %s243 = scalar_lea.vmem [#allocation2], %s242
        %p244 = pneg %p42
        %p245 = pneg %p39
        %s246 = sand.u32 %s55, 1
        %s247 = scalar_lea.sflag [#allocation5], %s246
        %s248 = sand.u32 %s55, 1
        %s249 = smul.addr %s248, 4
        %s250 = scalar_lea.vmem [#allocation4], %s249
        %p251 = pneg %p68
        %p252 = pneg %p65
        %p253 = scmp.lt.s32.totalorder %s21, 1
        %s254 = scalar_select %p253, %s21, 1
        %s255 = smul.addr %s254, 8
        %s256 = scalar_lea.vmem %s2, %s255
        %p257 = pneg %p94
        %p258 = pneg %p91
        %p259 = scmp.lt.s32.totalorder %s21, 1
        %s260 = scalar_select %p259, %s21, 1
        %s261 = scalar_lea.vmem %s3, %s260
        %p262 = pneg %p120
        %p263 = pneg %p117
        %p264 = pneg %p146
        %p265 = pneg %p143
        %p266 = scmp.lt.s32.totalorder %s21, 1
        %s267 = scalar_select %p266, %s21, 1
        %s268 = smul.addr %s267, 8
        %s269 = scalar_lea.vmem %s4, %s268
        %p270 = scmp.lt.s32.totalorder %s21, 1
        %s271 = scalar_select %p270, %s21, 1
        %s272 = smul.addr %s271, 8
        %s273 = scalar_lea.vmem %s2, %s272
        %p274 = scmp.lt.s32.totalorder %s21, 1
        %s275 = scalar_select %p274, %s21, 1
        %s276 = scalar_lea.vmem %s3, %s275
        %p277 = scmp.lt.s32.totalorder %s21, 1
        %s278 = scalar_select %p277, %s21, 1
        %s279 = smul.addr %s278, 8
        %s280 = scalar_lea.vmem %s4, %s279
        %v281 = vld [vmem:[%s273] sm:$0xff]
        %v282 = vld [vmem:[%s276] sm:$0x1]
        %v283 = vlaneseq
        %v284 = vshrl.u32 %v283, 7
        %v285 = vlaneseq
        %v286 = vshrl.u32 %v285, 7
        %v287 = vsub.s32 0, %v286
        %v288 = vrot.slane %v282, %v287
        %vm289 = vcmp.eq.s32.totalorder %v284, %v288
        %v290 = vsel %vm289, 1, 0
        %v291 = vcvt.s32.f32 %v290
        %vm292 = vcmask 523264
        %v293 = vsel %vm292, %v281, -inf
        %v294 = vrot.slane %v293, 4
        %v295 = vmax.f32 %v293, %v294
        %v296 = vrot.slane %v295, 2
        %v297 = vmax.f32 %v295, %v296
        %v298 = vrot.slane %v297, 1
        %v299 = vmax.f32 %v297, %v298
        %v300 = vsub.f32 %v281, %v299
        %v301 = vmul.f32 %v300, 1.442695
        %v302 = vpow.pop %v301
        %v303 = vsel %vm292, %v302, 0.0
        %v304 = vrot.slane %v303, 4
        %v305 = vadd.f32 %v303, %v304
        %v306 = vrot.slane %v305, 2
        %v307 = vadd.f32 %v305, %v306
        %v308 = vrot.slane %v307, 1
        %v309 = vadd.f32 %v307, %v308
        %v310 = vlog2.pop %v309
        %v311 = vmul.f32 %v310, 0.6931472
        %v312 = vadd.f32 %v299, %v311
        %v313 = vmul.f32 %v281, %v291
        %v314 = vsel %vm292, %v313, 0.0
        %v315 = vrot.slane %v314, 4
        %v316 = vadd.f32 %v314, %v315
        %v317 = vrot.slane %v316, 2
        %v318 = vadd.f32 %v316, %v317
        %v319 = vrot.slane %v318, 1
        %v320 = vadd.f32 %v318, %v319
        %v321 = vsub.f32 %v312, %v320
        %vm322 = vcmp.ne.s32.totalorder %v282, 0
        %vm323 = vmxor %vm322, 1
        %v324 = vsel %vm322, 1, 0
        %v325 = vcvt.s32.f32 %v324
        %vm326 = vcmask 516096
        %v327 = vsel %vm326, %v325, 0.0
        %328 = vadd.xlane.f32.xlu0 %v327
        %v329 = vpop.xlane.xlu0 %328
        %v330 = vrot.slane %v329, 4
        %v331 = vadd.f32 %v329, %v330
        %v332 = vrot.slane %v331, 2
        %v333 = vadd.f32 %v331, %v332
        %v334 = vrot.slane %v333, 1
        %v335 = vadd.f32 %v333, %v334
        %s336 = vtos %v335
        %v337 = vld [vmem:[%s225] sm:$0xf]
        %v338 = vld [vmem:[%s234] sm:$0xf]
        %v339 = vsub.f32 %v337, %v338
        %v340 = vand.u32 2147483647, %v339
        %vm341 = vcmp.lt.f32.partialorder %v340, 1.0
        %v342 = vmul.f32 %v340, 0.5
        %v343 = vmul.f32 %v342, %v340
        %v344 = vsub.f32 %v340, 0.5
        %v345 = vsel %vm341, %v343, %v344
        %v347 = vlaneseq
        %v348 = vshrl.u32 %v347, 7
        %v349 = vsub.s32 0, %v348
        %v350 = vrot.slane %v325, %v349
        %v352 = vmul.f32 %v345, %v350
        %vm353 = vcmask 519168
        %v354 = vsel %vm353, %v352, 0.0
        %355 = vadd.xlane.f32.xlu0 %v354
        %v356 = vpop.xlane.xlu0 %355
        %v357 = vrot.slane %v356, 4
        %v358 = vadd.f32 %v356, %v357
        %v359 = vrot.slane %v358, 2
        %v360 = vadd.f32 %v358, %v359
        %v361 = vrot.slane %v360, 1
        %v362 = vadd.f32 %v360, %v361
        %s363 = vtos %v362
        %v364 = vmul.f32 %v321, %v325
        %v365 = vsel %vm326, %v364, 0.0
        %366 = vadd.xlane.f32.xlu0 %v365
        %v367 = vpop.xlane.xlu0 %366
        %v368 = vrot.slane %v367, 4
        %v369 = vadd.f32 %v367, %v368
        %v370 = vrot.slane %v369, 2
        %v371 = vadd.f32 %v369, %v370
        %v372 = vrot.slane %v371, 1
        %v373 = vadd.f32 %v371, %v372
        %s374 = vtos %v373
        %v375 = vsel %vm323, %v321, -1e+30
        %s376 = smul.f32 %s336, 3.0
        %v377 = vadd.s32 %v284, 8
        %v378 = vadd.s32 %v284, 16
        %v379 = vadd.s32 %v284, 24
        %v380 = vadd.s32 %v284, 32
        %v381 = vadd.s32 %v284, 40
        %v382 = vadd.s32 %v284, 48
        %v383 = vadd.s32 %v284, 56
        %v384 = vlaneseq
        %v385 = vand.u32 %v384, 127
        %vm386 = vcmp.eq.s32.totalorder %v284, %v385
        %vm387 = vcmp.eq.s32.totalorder %v377, %v385
        %vm388 = vcmp.eq.s32.totalorder %v378, %v385
        %vm389 = vcmp.eq.s32.totalorder %v379, %v385
        %vm390 = vcmp.eq.s32.totalorder %v380, %v385
        %vm391 = vcmp.eq.s32.totalorder %v381, %v385
        %vm392 = vcmp.eq.s32.totalorder %v382, %v385
        %vm393 = vcmp.eq.s32.totalorder %v383, %v385
        %v394 = vsel %vm386, 1, 0
        %v395 = vsel %vm387, 1, 0
        %v396 = vsel %vm388, 1, 0
        %v397 = vsel %vm389, 1, 0
        %v398 = vsel %vm390, 1, 0
        %v399 = vsel %vm391, 1, 0
        %v400 = vsel %vm392, 1, 0
        %v401 = vsel %vm393, 1, 0
        %v402 = vcvt.s32.f32 %v394
        %v403 = vcvt.s32.f32 %v395
        %v404 = vcvt.s32.f32 %v396
        %v405 = vcvt.s32.f32 %v397
        %v406 = vcvt.s32.f32 %v398
        %v407 = vcvt.s32.f32 %v399
        %v408 = vcvt.s32.f32 %v400
        %v409 = vcvt.s32.f32 %v401
        %v411 = vlaneseq
        %v412 = vshrl.u32 %v411, 7
        %v413 = vsub.s32 0, %v412
        %v414 = vrot.slane %v375, %v413
        %v416 = vmul.f32 %v402, %v414
        %v417 = vmul.f32 %v403, %v414
        %v418 = vmul.f32 %v404, %v414
        %v419 = vmul.f32 %v405, %v414
        %v420 = vmul.f32 %v406, %v414
        %v421 = vmul.f32 %v407, %v414
        %v422 = vmul.f32 %v408, %v414
        %v423 = vmul.f32 %v409, %v414
        %v424 = vsel %vm292, %v416, 0.0
        %425 = vadd.xlane.f32.xlu0 %v424
        %v426 = vpop.xlane.xlu0 %425
        %v427 = vsel %vm292, %v417, 0.0
        %428 = vadd.xlane.f32.xlu0 %v427
        %v429 = vpop.xlane.xlu0 %428
        %v430 = vsel %vm292, %v418, 0.0
        %431 = vadd.xlane.f32.xlu0 %v430
        %v432 = vpop.xlane.xlu0 %431
        %v433 = vsel %vm292, %v419, 0.0
        %434 = vadd.xlane.f32.xlu0 %v433
        %v435 = vpop.xlane.xlu0 %434
        %v436 = vsel %vm292, %v420, 0.0
        %437 = vadd.xlane.f32.xlu0 %v436
        %v438 = vpop.xlane.xlu0 %437
        %v439 = vsel %vm292, %v421, 0.0
        %440 = vadd.xlane.f32.xlu0 %v439
        %v441 = vpop.xlane.xlu0 %440
        %v442 = vsel %vm292, %v422, 0.0
        %443 = vadd.xlane.f32.xlu0 %v442
        %v444 = vpop.xlane.xlu0 %443
        %v445 = vsel %vm292, %v423, 0.0
        %446 = vadd.xlane.f32.xlu0 %v445
        %v447 = vpop.xlane.xlu0 %446
        %vm448 = vcmp.gt.f32.partialorder %v426, %v414
        %vm449 = vcmp.gt.f32.partialorder %v429, %v414
        %vm450 = vcmp.gt.f32.partialorder %v432, %v414
        %vm451 = vcmp.gt.f32.partialorder %v435, %v414
        %vm452 = vcmp.gt.f32.partialorder %v438, %v414
        %vm453 = vcmp.gt.f32.partialorder %v441, %v414
        %vm454 = vcmp.gt.f32.partialorder %v444, %v414
        %vm455 = vcmp.gt.f32.partialorder %v447, %v414
        %v456 = vsel %vm448, 1, 0
        %v457 = vsel %vm449, 1, 0
        %v458 = vsel %vm450, 1, 0
        %v459 = vsel %vm451, 1, 0
        %v460 = vsel %vm452, 1, 0
        %v461 = vsel %vm453, 1, 0
        %v462 = vsel %vm454, 1, 0
        %v463 = vsel %vm455, 1, 0
        %v464 = vcvt.s32.f32 %v456
        %v465 = vcvt.s32.f32 %v457
        %v466 = vcvt.s32.f32 %v458
        %v467 = vcvt.s32.f32 %v459
        %v468 = vcvt.s32.f32 %v460
        %v469 = vcvt.s32.f32 %v461
        %v470 = vcvt.s32.f32 %v462
        %v471 = vcvt.s32.f32 %v463
        %v473 = vsel %vm292, 1.0, 0
        %475 = vmatprep.subr.mxu0 0.0
        %476 = vmatpush1.msra.mxu0 %v464
        %477 = vmatprep.subr.mxu0 0.0
        %478 = vmatpush1.msra.mxu0 %v465
        %479 = vmatprep.subr.mxu0 0.0
        %480 = vmatpush1.msra.mxu0 %v466
        %481 = vmatprep.subr.mxu0 0.0
        %482 = vmatpush1.msra.mxu0 %v467
        %483 = vmatprep.subr.mxu0 0.0
        %484 = vmatpush1.msra.mxu0 %v468
        %485 = vmatprep.subr.mxu0 0.0
        %486 = vmatpush1.msra.mxu0 %v469
        %487 = vmatprep.subr.mxu0 0.0
        %488 = vmatpush1.msra.mxu0 %v470
        %489 = vmatprep.subr.mxu0 0.0
        %490 = vmatpush1.msra.mxu0 %v471
        %491 = vmatprep.subr.mxu0 0.0
        %492 = vmatpush1.msra.mxu0 0.0
        %493 = vmatprep.subr.mxu0 0.0
        %494 = vmatpush1.msra.mxu0 0.0
        %495 = vmatprep.subr.mxu0 0.0
        %496 = vmatpush1.msra.mxu0 0.0
        %497 = vmatprep.subr.mxu0 0.0
        %498 = vmatpush1.msra.mxu0 0.0
        %499 = vmatprep.subr.mxu0 0.0
        %500 = vmatpush1.msra.mxu0 0.0
        %501 = vmatprep.subr.mxu0 0.0
        %502 = vmatpush1.msra.mxu0 0.0
        %503 = vmatprep.subr.mxu0 0.0
        %504 = vmatpush1.msra.mxu0 0.0
        %505 = vmatprep.subr.mxu0 0.0
        %506 = vmatpush1.msra.mxu0 0.0
        %507 = vmatprep.subr.mxu0 0.0
        %508 = vmatpush1.msra.mxu0 0.0
        %509 = vmatprep.subr.mxu0 0.0
        %510 = vmatpush1.msra.mxu0 0.0
        %511 = vmatprep.subr.mxu0 0.0
        %512 = vmatpush1.msra.mxu0 0.0
        %513 = vmatprep.subr.mxu0 0.0
        %514 = vmatpush1.msra.mxu0 0.0
        %515 = vmatprep.subr.mxu0 0.0
        %516 = vmatpush1.msra.mxu0 0.0
        %517 = vmatprep.subr.mxu0 0.0
        %518 = vmatpush1.msra.mxu0 0.0
        %519 = vmatprep.subr.mxu0 0.0
        %520 = vmatpush1.msra.mxu0 0.0
        %521 = vmatprep.subr.mxu0 0.0
        %522 = vmatpush1.msra.mxu0 0.0
        %523 = vmatprep.subr.mxu0 0.0
        %524 = vmatpush1.msra.mxu0 0.0
        %525 = vmatprep.subr.mxu0 0.0
        %526 = vmatpush1.msra.mxu0 0.0
        %527 = vmatprep.subr.mxu0 0.0
        %528 = vmatpush1.msra.mxu0 0.0
        %529 = vmatprep.subr.mxu0 0.0
        %530 = vmatpush1.msra.mxu0 0.0
        %531 = vmatprep.subr.mxu0 0.0
        %532 = vmatpush1.msra.mxu0 0.0
        %533 = vmatprep.subr.mxu0 0.0
        %534 = vmatpush1.msra.mxu0 0.0
        %535 = vmatprep.subr.mxu0 0.0
        %536 = vmatpush1.msra.mxu0 0.0
        %537 = vmatprep.subr.mxu0 0.0
        %538 = vmatpush1.msra.mxu0 0.0
        %539 = vmatprep.mubr.f32.mxu0 0.0
        %540 = vmatmul.mubr.f32.gmra.mrb[0].mxu0 %v473
        %v541 = vpop.f32.mrb[0].mxu0
        %v542 = vadd.f32 0.0, %v541
        %v543 = vpop.f32.mrb[0].mxu0
        %544 = vdwg.mxu0
        %v545 = vstv %s376
        %vm546 = vcmp.lt.f32.partialorder %v542, %v545
        %vm547 = vmand %vm546, %vm323
        %v548 = vsel %vm547, %v321, 0.0
        %v549 = vsel %vm326, %v548, 0.0
        %550 = vadd.xlane.f32.xlu0 %v549
        %v551 = vpop.xlane.xlu0 %550
        %v552 = vrot.slane %v551, 4
        %v553 = vadd.f32 %v551, %v552
        %v554 = vrot.slane %v553, 2
        %v555 = vadd.f32 %v553, %v554
        %v556 = vrot.slane %v555, 1
        %v557 = vadd.f32 %v555, %v556
        %s558 = vtos %v557
        %s559 = sadd.f32 %s558, 0.0
        %vm560 = vcmp.eq.s32.totalorder %v385, 0
        %vm561 = vcmp.eq.s32.totalorder %v385, 1
        %vm562 = vcmp.eq.s32.totalorder %v385, 2
        %vm563 = vcmp.eq.s32.totalorder %v385, 3
        %v564 = vstv %s559
        %v565 = vsel %vm563, %v564, 0.0
        %v566 = vstv %s374
        %v567 = vsel %vm562, %v566, %v565
        %v568 = vstv %s336
        %v569 = vsel %vm561, %v568, %v567
        %v570 = vstv %s363
        %v571 = vsel %vm560, %v570, %v569
        %572 = vst [vmem:[%s280] sm:$0xff] %v571
        %p573 = scmp.lt.s32.totalorder %s21, 1
        %s574 = scalar_select %p573, %s21, 1
        %s575 = smul.addr %s574, 8
        %s576 = scalar_lea.vmem %s4, %s575
        // Predicated region
        $region45: #{multibox_loss_sums.1} parent=35 // pred_check
          %p577 = pneg %p143
        $region46: #{multibox_loss_sums.1} parent=35 // pred_check_branch
          %579 = sbr.rel (%p577) target = $region48
        $region47: #{multibox_loss_sums.1} parent=35 // pred_region
          _
        $region48: #{multibox_loss_sums.1} parent=35 // pred_fallthru
          _
      $region36: #{multibox_loss_sums.1} parent=5 // pred_fallthru
        _
      %p580 = scmp.le.s32.totalorder 2, %s16
      // Predicated region
      $region49: #{multibox_loss_sums.1} parent=5 // pred_check
        %p581 = pneg %p580
      $region50: #{multibox_loss_sums.1} parent=5 // pred_check_branch
        %583 = sbr.rel (%p581) target = $region52
      $region51: #{multibox_loss_sums.1} parent=5 // pred_region
        %s584 = ssub.s32 %s16, 2
        // Predicated region
        $region53: #{multibox_loss_sums.1} parent=51 // pred_check
          %p585 = pneg %p149
        $region54: #{multibox_loss_sums.1} parent=51 // pred_check_branch
          %587 = sbr.rel (%p585) target = $region56
        $region55: #{multibox_loss_sums.1} parent=51 // pred_region
          %p588 = scmp.lt.s32.totalorder %s22, 1
          %s589 = scalar_select %p588, %s22, 1
          %s590 = smul.addr %s589, 8
          %s591 = scalar_lea.vmem %s4, %s590
        $region56: #{multibox_loss_sums.1} parent=51 // pred_fallthru
          _
      $region52: #{multibox_loss_sums.1} parent=5 // pred_fallthru
        _
    $region6: #{multibox_loss_sums.1} parent=1 // loop_footer
      %s20 = sadd.s32 1, %s16
    $region7: #{multibox_loss_sums.1} parent=1 // loop_footer_branch
      %15 = sbr.rel target = $region3
    $region8: #{multibox_loss_sums.1} parent=1 // loop_exit
      _
    %592 = vsyncpa [#allocation3], 1
    %s593 = scalar_lea.sflag [#allocation3], 1
    %594 = vsyncpa %s593, 1
    %595 = vsyncpa [#allocation5], 1
    %s596 = scalar_lea.sflag [#allocation5], 1
    %597 = vsyncpa %s596, 1

</llo_original>
